<compile_context>
chip_gen: v6e
topology: v6e:2x2x1
jax: 0.10.0
libtpu: 0.0.40
codegen_flags: <defaults>
</compile_context>

<pallas_src>
import functools

import jax
import jax.numpy as jnp
from jax.experimental import pallas as pl
from jax.experimental.pallas import tpu as pltpu

_LANES = 128


def _cdiv(a, b):
    return -(-a // b)


def _round_up(a, b):
    return _cdiv(a, b) * b


def _sublane_multiple(dtype):
    # f32 -> 8 rows/vreg, bf16/f16 -> 16, int8/fp8 -> 32.
    return max(8, 32 // max(jnp.dtype(dtype).itemsize, 1))


def _uses_exp_path(k):
    k = float(k)
    return not (k == 0.0 or k == 1.0 or (k.is_integer() and 2.0 <= k <= 8.0))


def _pow_from_log(base, clamped_log, k):
    """base ** k with k a trace-time Python float.

    Returns None when k == 0 (factor == 1, preserving 0**0 == 1 like the
    PyTorch reference). Small integer exponents become plain VPU multiplies;
    the general path reuses the already-computed clamped log (one EUP exp).
    The clamp only matters where `base` underflows, and there the matching
    log factor of that loss term is 0, so the product is unchanged.
    """
    k = float(k)
    if k == 0.0:
        return None
    if k == 1.0:
        return base
    if k.is_integer() and 2.0 <= k <= 8.0:
        out = base
        for _ in range(int(k) - 1):
            out = out * base
        return out
    # TODO(synk): on v7x with non-integer gamma/zeta the single EUP slot can
    # become binding; a bf16 exp for the weight factor would halve EUP work.
    return jnp.exp(jnp.float32(k) * clamped_log)


def _afl_kernel(pred_ref, tgt_ref, out_ref, acc_ref, *, gamma, zeta,
                valid_rows, block_rows, blocks_per_split, need_mask,
                binary_target):
    j = pl.program_id(1)

    @pl.when(j == 0)
    def _():
        acc_ref[...] = jnp.zeros_like(acc_ref)

    p = pred_ref[...].astype(jnp.float32)
    t = tgt_ref[...].astype(jnp.float32)
    one_minus_p = 1.0 - p                      # hoisted, reused by log and pow

    log_p = jnp.maximum(jnp.log(p), jnp.float32(-100.0))
    log_1mp = jnp.maximum(jnp.log(one_minus_p), jnp.float32(-100.0))

    w_pos = _pow_from_log(one_minus_p, log_1mp, gamma)   # (1 - pred) ** gamma
    w_neg = _pow_from_log(p, log_p, zeta)                # pred ** zeta

    if binary_target:
        # Hard 0/1 targets: single select instead of the two-sided blend.
        pos = log_p if w_pos is None else w_pos * log_p
        neg = log_1mp if w_neg is None else w_neg * log_1mp
        loss = -jnp.where(t > 0.5, pos, neg)
    else:
        pos = t * log_p
        if w_pos is not None:
            pos = w_pos * pos
        neg = (1.0 - t) * log_1mp
        if w_neg is not None:
            neg = w_neg * neg
        loss = -(pos + neg)

    if need_mask:
        # In-kernel handling of the ragged row tail (replaces host-side pad).
        # Uses the *unclamped* logical block position so duplicated (clamped)
        # blocks and the partial final block contribute exactly zero.
        start = (pl.program_id(0) * blocks_per_split + j) * block_rows
        row_id = start + jax.lax.broadcasted_iota(jnp.int32, loss.shape, 0)
        loss = jnp.where(row_id < valid_rows, loss, jnp.float32(0.0))

    # Reduce the whole block to one (1, 128) vreg row (VALU adds + one XLU
    # sublane reduce) and accumulate into the tiny scratch.
    acc_ref[...] += jnp.sum(loss, axis=0, keepdims=True)

    @pl.when(j == pl.num_programs(1) - 1)
    def _():
        out_ref[0, 0] = jnp.sum(acc_ref[...])


def _device_config():
    """Generation-aware tiling: (splits, core_parallel, max block rows, bufs)."""
    try:
        kind = jax.devices()[0].device_kind.lower()
    except Exception:
        kind = ""
    if "v7" in kind:
        # 2 TensorCores per chip, 64 MiB VMEM per TC.
        return dict(splits=2, core_parallel=True, max_rows=8192, bufs=3)
    if "v6" in kind:
        return dict(splits=1, core_parallel=False, max_rows=8192, bufs=3)
    if "v5p" in kind:
        return dict(splits=2, core_parallel=False, max_rows=4096, bufs=3)
    if "v5" in kind:                              # v5e / v5 lite
        return dict(splits=1, core_parallel=False, max_rows=4096, bufs=3)
    if "v4" in kind:
        return dict(splits=2, core_parallel=False, max_rows=2048, bufs=2)
    return dict(splits=1, core_parallel=False, max_rows=2048, bufs=2)


def asymmetrical_focal_loss(pred, target, gamma=0.0, zeta=0.0, *,
                            binary_target=False, max_block_rows=None):
    """Pallas TPU implementation of AsymmetricalFocalLoss.forward (mean loss)."""
    assert pred.shape == target.shape, (pred.shape, target.shape)
    n = int(pred.size)
    assert n > 0

    cfg = _device_config()
    max_rows = int(max_block_rows) if max_block_rows is not None else cfg["max_rows"]
    itembytes = jnp.dtype(pred.dtype).itemsize + jnp.dtype(target.dtype).itemsize

    pred_f = pred.reshape(-1)
    tgt_f = target.reshape(-1)

    rows = _cdiv(n, _LANES)
    elem_pad = rows * _LANES - n
    if elem_pad:
        # Only the sub-128 ragged remainder is ever padded.  pred=1 / target=1
        # makes BOTH loss terms exactly zero, so no mask stream is needed.
        # TODO(synk): this still costs one extra HBM pass for shapes whose
        # numel is not a multiple of 128; multiples of 128 are zero-copy.
        pred_f = jnp.pad(pred_f, (0, elem_pad), constant_values=1)
        tgt_f = jnp.pad(tgt_f, (0, elem_pad), constant_values=1)

    pred2 = pred_f.reshape(rows, _LANES)
    tgt2 = tgt_f.reshape(rows, _LANES)

    # Block rows: full-dim block for small inputs (always legal), otherwise a
    # multiple of the narrowest input dtype's sublane packing.
    row_mult = max(_sublane_multiple(pred.dtype), _sublane_multiple(target.dtype))
    if rows <= max_rows:
        block_rows = rows
    else:
        block_rows = max((max_rows // row_mult) * row_mult, row_mult)
        block_rows = min(block_rows, rows)

    total_blocks = _cdiv(rows, block_rows)
    splits = cfg["splits"] if total_blocks >= cfg["splits"] else 1
    bps = _cdiv(total_blocks, splits)                   # blocks per split
    need_clamp = splits * bps > total_blocks            # fully-overshooting blocks
    need_mask = splits * bps * block_rows > rows        # any ragged coverage
    last_block = total_blocks - 1

    if need_clamp:
        def idx_map(c, j, _bps=bps, _last=last_block):
            return (jnp.minimum(c * _bps + j, _last), 0)
    else:
        def idx_map(c, j, _bps=bps):
            return (c * _bps + j, 0)

    n_buf = max(2, min(cfg["bufs"], bps))
    in_spec = pl.BlockSpec((block_rows, _LANES), idx_map,
                           pipeline_mode=pl.Buffered(n_buf))
    out_spec = pl.BlockSpec((1, 1), lambda c, j: (c, 0),
                            memory_space=pltpu.MemorySpace.SMEM)

    if splits == 2 and cfg["core_parallel"]:
        dim_sem = (pltpu.CORE_PARALLEL, pltpu.ARBITRARY)   # true 2-TC split (v7x)
    elif splits == 2:
        dim_sem = ("parallel", "arbitrary")                # megacore (v4/v5p)
    else:
        dim_sem = ("arbitrary", "arbitrary")

    # Scoped VMEM: 2 streams x n_buf blocks + the (1,128) accumulator.
    vmem_need = n_buf * block_rows * _LANES * itembytes + (64 << 10)
    vmem_limit = None
    if vmem_need > (12 << 20):
        vmem_limit = int(min(max(vmem_need + (4 << 20), 32 << 20), 48 << 20))

    n_exp = int(_uses_exp_path(gamma)) + int(_uses_exp_path(zeta))
    cost = pl.CostEstimate(flops=12 * n,
                           transcendentals=(2 + n_exp) * n,
                           bytes_accessed=n * itembytes + 4 * splits)

    kernel = functools.partial(
        _afl_kernel, gamma=float(gamma), zeta=float(zeta),
        valid_rows=rows, block_rows=block_rows, blocks_per_split=bps,
        need_mask=need_mask, binary_target=bool(binary_target))

    partials = pl.pallas_call(
        kernel,
        out_shape=jax.ShapeDtypeStruct((splits, 1), jnp.float32),
        grid_spec=pltpu.PrefetchScalarGridSpec(
            num_scalar_prefetch=0,
            grid=(splits, bps),
            in_specs=[in_spec, in_spec],
            out_specs=out_spec,
            scratch_shapes=[pltpu.VMEM((1, _LANES), jnp.float32)],
        ),
        compiler_params=pltpu.CompilerParams(
            dimension_semantics=dim_sem,
            vmem_limit_bytes=vmem_limit),
        cost_estimate=cost,
    )(pred2, tgt2)

    return jnp.sum(partials) * jnp.float32(1.0 / n)


def _reference(pred, target, gamma=0.0, zeta=0.0):
    p = pred.astype(jnp.float32)
    t = target.astype(jnp.float32)
    log_p = jnp.maximum(jnp.log(p), -100.0)
    log_1mp = jnp.maximum(jnp.log(1.0 - p), -100.0)
    losses = -((1.0 - p) ** gamma * t * log_p
               + p ** zeta * (1.0 - t) * log_1mp)
    return jnp.mean(losses)


if __name__ == "__main__":
    key = jax.random.PRNGKey(0)
    k1, k2 = jax.random.split(key)

    # NCHW segmentation-style prediction / target pair.
    shape = (2, 4, 16, 16)
    pred = jax.nn.sigmoid(jax.random.normal(k1, shape, jnp.float32))
    # Exercise the clamp_min(-100) / pow corner cases: exact 0.0 and 1.0 preds.
    pred = pred.at[0, 0, 0, 0].set(0.0).at[0, 0, 0, 1].set(1.0)
    target = (jax.random.uniform(k2, shape) > 0.5).astype(jnp.float32)

    def check(loss, ref, tag):
        loss = jax.block_until_ready(loss)
        assert jnp.allclose(loss, ref, rtol=1e-5, atol=1e-6), (
            tag, float(loss), float(ref))

    # Module default, integer, and non-integer exponents (all trace-time paths).
    for gamma, zeta in [(0.0, 0.0), (2.0, 1.0), (1.5, 0.5)]:
        check(asymmetrical_focal_loss(pred, target, gamma, zeta),
              _reference(pred, target, gamma, zeta), ("f32", gamma, zeta))

    # Gated hard-binary-target fast path (exact for 0/1 labels).
    check(asymmetrical_focal_loss(pred, target, 2.0, 1.0, binary_target=True),
          _reference(pred, target, 2.0, 1.0), "binary")

    # Narrow-dtype streaming (bf16 in HBM, upcast in-register).
    pred_bf = pred.astype(jnp.bfloat16)
    tgt_bf = target.astype(jnp.bfloat16)
    check(asymmetrical_focal_loss(pred_bf, tgt_bf, 1.5, 0.5),
          _reference(pred_bf.astype(jnp.float32), tgt_bf.astype(jnp.float32),
                     1.5, 0.5), "bf16")

    # Ragged numel (n % 128 != 0): single full-dim block, value-padded tail.
    k3, k4 = jax.random.split(k2)
    shape2 = (3, 5, 7, 11)                     # n = 1155
    pred_r = jax.nn.sigmoid(jax.random.normal(k3, shape2, jnp.float32))
    tgt_r = (jax.random.uniform(k4, shape2) > 0.5).astype(jnp.float32)
    check(asymmetrical_focal_loss(pred_r, tgt_r, 2.0, 0.0),
          _reference(pred_r, tgt_r, 2.0, 0.0), "ragged_numel")

    # Multi-block grid with in-kernel tail-row masking + Buffered(3) pipeline
    # (row count 17 not a multiple of the forced 8-row block).
    shape3 = (2, 4, 16, 17)                    # n = 2176 -> 17 rows of 128
    k5, k6 = jax.random.split(k4)
    pred_m = jax.nn.sigmoid(jax.random.normal(k5, shape3, jnp.float32))
    tgt_m = (jax.random.uniform(k6, shape3) > 0.5).astype(jnp.float32)
    check(asymmetrical_focal_loss(pred_m, tgt_m, 1.5, 0.5, max_block_rows=8),
          _reference(pred_m, tgt_m, 1.5, 0.5), "masked_tail")

    print("KERNEL_OK")
</pallas_src>

<mosaic_0001>
module attributes {stable_mosaic.version = 11 : i64} {
  func.func @_afl_kernel(%arg0: i32, %arg1: i32, %arg2: memref<16x128xf32, #tpu.memory_space<vmem>>, %arg3: memref<16x128xf32, #tpu.memory_space<vmem>>, %arg4: memref<1x1xf32, #tpu.memory_space<smem>>, %arg5: memref<1x128xf32, #tpu.memory_space<vmem>>) attributes {dimension_semantics = [#tpu.dimension_semantics<arbitrary>, #tpu.dimension_semantics<arbitrary>], iteration_bounds = array<i64: 1, 1>, scalar_prefetch = 0 : i64, scratch_operands = 1 : i64, tpu.core_type = #tpu.core_type<tc>, window_params = [{pipeline_mode = #tpu.pipeline_mode<double_buffered>, transform_indices = @transform_0, window_bounds = array<i64: 16, 128>}, {pipeline_mode = #tpu.pipeline_mode<double_buffered>, transform_indices = @transform_1, window_bounds = array<i64: 16, 128>}, {transform_indices = @transform_2, window_bounds = array<i64: 1, 1>}]} {
    %c0_i32 = arith.constant 0 : i32
    %0 = arith.cmpi eq, %arg1, %c0_i32 : i32
    %1 = arith.extui %0 : i1 to i32
    %c0_i32_0 = arith.constant 0 : i32
    %2 = arith.cmpi ne, %1, %c0_i32_0 : i32
    scf.if %2 {
      %cst_15 = arith.constant 0.000000e+00 : f32
      %28 = vector.broadcast %cst_15 : f32 to vector<1x128xf32>
      %c0_16 = arith.constant 0 : index
      %c0_17 = arith.constant 0 : index
      %29 = vector.load %arg5[%c0_16, %c0_17] : memref<1x128xf32, #tpu.memory_space<vmem>>, vector<1x128xf32>
      tpu.vector_store %arg5[%c0_16, %c0_17], %28 {strides = array<i32>} : memref<1x128xf32, #tpu.memory_space<vmem>>, vector<1x128xf32>,
    } else {
    }
    %c0 = arith.constant 0 : index
    %c0_1 = arith.constant 0 : index
    %3 = vector.load %arg2[%c0, %c0_1] : memref<16x128xf32, #tpu.memory_space<vmem>>, vector<16x128xf32>
    %c0_2 = arith.constant 0 : index
    %c0_3 = arith.constant 0 : index
    %4 = vector.load %arg3[%c0_2, %c0_3] : memref<16x128xf32, #tpu.memory_space<vmem>>, vector<16x128xf32>
    %cst = arith.constant 1.000000e+00 : f32
    %5 = vector.broadcast %cst : f32 to vector<16x128xf32>
    %6 = arith.subf %5, %3 : vector<16x128xf32>
    %7 = math.log %3 : vector<16x128xf32>
    %cst_4 = arith.constant -1.000000e+02 : f32
    %8 = vector.broadcast %cst_4 : f32 to vector<16x128xf32>
    %9 = arith.maximumf %7, %8 : vector<16x128xf32>
    %10 = math.log %6 : vector<16x128xf32>
    %cst_5 = arith.constant -1.000000e+02 : f32
    %11 = vector.broadcast %cst_5 : f32 to vector<16x128xf32>
    %12 = arith.maximumf %10, %11 : vector<16x128xf32>
    %13 = arith.mulf %4, %9 : vector<16x128xf32>
    %cst_6 = arith.constant 1.000000e+00 : f32
    %14 = vector.broadcast %cst_6 : f32 to vector<16x128xf32>
    %15 = arith.subf %14, %4 : vector<16x128xf32>
    %16 = arith.mulf %15, %12 : vector<16x128xf32>
    %17 = arith.addf %13, %16 : vector<16x128xf32>
    %cst_7 = arith.constant 0.000000e+00 : f32
    %18 = vector.broadcast %cst_7 : f32 to vector<16x128xf32>
    %19 = arith.subf %18, %17 : vector<16x128xf32>
    %c0_8 = arith.constant 0 : index
    %c0_9 = arith.constant 0 : index
    %20 = vector.load %arg5[%c0_8, %c0_9] : memref<1x128xf32, #tpu.memory_space<vmem>>, vector<1x128xf32>
    %cst_10 = arith.constant dense<0.000000e+00> : vector<128xf32>
    %21 = vector.multi_reduction <add>, %19, %cst_10 [0] : vector<16x128xf32> to vector<128xf32>
    %22 = vector.shape_cast %21 : vector<128xf32> to vector<1x128xf32>
    %23 = arith.addf %20, %22 : vector<1x128xf32>
    %c0_11 = arith.constant 0 : index
    %c0_12 = arith.constant 0 : index
    %24 = vector.load %arg5[%c0_11, %c0_12] : memref<1x128xf32, #tpu.memory_space<vmem>>, vector<1x128xf32>
    tpu.vector_store %arg5[%c0_11, %c0_12], %23 {strides = array<i32>} : memref<1x128xf32, #tpu.memory_space<vmem>>, vector<1x128xf32>,
    %c0_i32_13 = arith.constant 0 : i32
    %25 = arith.cmpi eq, %arg1, %c0_i32_13 : i32
    %26 = arith.extui %25 : i1 to i32
    %c0_i32_14 = arith.constant 0 : i32
    %27 = arith.cmpi ne, %26, %c0_i32_14 : i32
    scf.if %27 {
      %c0_15 = arith.constant 0 : index
      %c0_16 = arith.constant 0 : index
      %28 = vector.load %arg5[%c0_15, %c0_16] : memref<1x128xf32, #tpu.memory_space<vmem>>, vector<1x128xf32>
      %29 = vector.shape_cast %28 : vector<1x128xf32> to vector<1x1x128xf32>
      %cst_17 = arith.constant dense<0.000000e+00> : vector<1xf32>
      %30 = vector.multi_reduction <add>, %29, %cst_17 [1, 2] : vector<1x1x128xf32> to vector<1xf32>
      %31 = vector.shape_cast %30 : vector<1xf32> to vector<1x1x1xf32>
      %32 = vector.extract %31[0, 0, 0] : f32 from vector<1x1x1xf32>
      %c0_18 = arith.constant 0 : index
      %c0_19 = arith.constant 0 : index
      %33 = memref.load %arg4[%c0_18, %c0_19] : memref<1x1xf32, #tpu.memory_space<smem>>
      memref.store %32, %arg4[%c0_18, %c0_19] : memref<1x1xf32, #tpu.memory_space<smem>>
    } else {
    }
    return
  }
  func.func @transform_0(%arg0: i32, %arg1: i32) -> (i32, i32) {
    %c1_i32 = arith.constant 1 : i32
    %0 = arith.muli %arg0, %c1_i32 : i32
    %1 = arith.addi %0, %arg1 : i32
    %c0_i32 = arith.constant 0 : i32
    %c0_i32_0 = arith.constant 0 : i32
    return %1, %c0_i32 : i32, i32
  }
  func.func @transform_1(%arg0: i32, %arg1: i32) -> (i32, i32) {
    %c1_i32 = arith.constant 1 : i32
    %0 = arith.muli %arg0, %c1_i32 : i32
    %1 = arith.addi %0, %arg1 : i32
    %c0_i32 = arith.constant 0 : i32
    %c0_i32_0 = arith.constant 0 : i32
    return %1, %c0_i32 : i32, i32
  }
  func.func @transform_2(%arg0: i32, %arg1: i32) -> (i32, i32) {
    %c0_i32 = arith.constant 0 : i32
    %c0_i32_0 = arith.constant 0 : i32
    return %arg0, %c0_i32 : i32, i32
  }
}

</mosaic_0001>

<llo_original>
// kernel: tpu_custom_call.1
$region0: #{tpu_custom_call.1}
  #allocation0 [shape = 'u32[]', space=smem, size = 0x4, offset = 0x4, fixed_abs, tag = 'smem constant byte address 0x4 - core index']
  #allocation1 [shape = 'u32[144,128]{1,0:T(1,128)}', space=vmem, size = 0x12000, scoped, tag = 'internal scratch']
  #allocation2 [shape = 'f32[1,128]{1,0:T(1,128)}', space=vmem, size = 0x200, scoped, tag = 'scratch operand']
  %s0 = inlined_call_operand.hbm [shape: f32[16,128], index: 0, kind: input, shape index: {}]
  %s1 = inlined_call_operand.hbm [shape: f32[16,128], index: 1, kind: input, shape index: {}]
  %s2 = inlined_call_operand.hbm [shape: f32[1,1], index: 2, kind: output, shape index: {}]
  %s3 = sld [smem:[#allocation0]]
  $region34: #{tpu_custom_call.1} parent=0
    _
  %s5 = ssub.s32 1, %s3
  %s6 = scalar_select 0, %s5, %s3
  $region1: #{tpu_custom_call.1} parent=0
    #allocation3 [shape = 'u8[8192]{0}', space=vmem, size = 0x2000, scoped, tag = 'input window, operand 0, single buffered']
    #allocation4 [shape = 's32[1]{0}', space=sflag, size = 0x4, scoped, tag = 'scoped memory for tpu_custom_call.1']
    #allocation5 [shape = 's32[1]{0}', space=sflag, size = 0x4, scoped, tag = 'scoped memory for tpu_custom_call.1']
    #allocation6 [shape = 'u8[8192]{0}', space=vmem, size = 0x2000, scoped, tag = 'input window, operand 1, single buffered']
    #allocation7 [shape = 's32[1]{0}', space=sflag, size = 0x4, scoped, tag = 'scoped memory for tpu_custom_call.1']
    #allocation8 [shape = 'u8[512]{0}', space=smem, size = 0x200, scoped, tag = 'output window, operand 0, single buffered']
    %7 = vsyncpa [#allocation4], 0
    %8 = vsyncpa [#allocation7], 0
    %9 = vsyncpa [#allocation5], 0
    // Predicated region
    $region2: #{tpu_custom_call.1} parent=1 // pred_check
      _
    $region3: #{tpu_custom_call.1} parent=1 // pred_check_branch
      %11 = sbr.rel (0) target = $region5
    $region4: #{tpu_custom_call.1} parent=1 // pred_region
      %s12 = sadd.s32 0, 0
      %s13 = smul.u32 2, %s12
      %s15 = ssub.s32 256, 256
      %16 = vsyncadd [#allocation4], %s15
      %s17 = smul.addr %s13, 128
      %s18 = scalar_lea.hbm %s0, %s17
      %s19 = sshll.u32 [#allocation3], 4
      %s20 = int_to_ptr.vmem [resolvable:$true] %s19
      %25 = dma.hbm_to_vmem [thread:$0]  %s18, 256, %s20, [#allocation4], 128, 128, 8
    $region5: #{tpu_custom_call.1} parent=1 // pred_fallthru
      _
    // Predicated region
    $region6: #{tpu_custom_call.1} parent=1 // pred_check
      _
    $region7: #{tpu_custom_call.1} parent=1 // pred_check_branch
      %27 = sbr.rel (0) target = $region9
    $region8: #{tpu_custom_call.1} parent=1 // pred_region
      %s28 = sadd.s32 0, 0
      %s29 = smul.u32 2, %s28
      %s31 = ssub.s32 256, 256
      %32 = vsyncadd [#allocation7], %s31
      %s33 = smul.addr %s29, 128
      %s34 = scalar_lea.hbm %s1, %s33
      %s35 = sshll.u32 [#allocation6], 4
      %s36 = int_to_ptr.vmem [resolvable:$true] %s35
      %41 = dma.hbm_to_vmem [thread:$0]  %s34, 256, %s36, [#allocation7], 128, 128, 8
    $region9: #{tpu_custom_call.1} parent=1 // pred_fallthru
      _
    // Predicated region
    $region10: #{tpu_custom_call.1} parent=1 // pred_check
      _
    $region11: #{tpu_custom_call.1} parent=1 // pred_check_branch
      %43 = sbr.rel (0) target = $region13
    $region12: #{tpu_custom_call.1} parent=1 // pred_region
      %44 = dma.done [#allocation4], 256
    $region13: #{tpu_custom_call.1} parent=1 // pred_fallthru
      _
    // Predicated region
    $region14: #{tpu_custom_call.1} parent=1 // pred_check
      _
    $region15: #{tpu_custom_call.1} parent=1 // pred_check_branch
      %46 = sbr.rel (0) target = $region17
    $region16: #{tpu_custom_call.1} parent=1 // pred_region
      %47 = dma.done [#allocation7], 256
    $region17: #{tpu_custom_call.1} parent=1 // pred_fallthru
      _
    %s48 = sadd.s32 0, 0
    %s49 = smul.u32 2, %s48
    %s50 = sadd.s32 0, 0
    %s51 = smul.u32 2, %s50
    %p52 = scmp.eq.s32.totalorder 0, 0
    // Predicated region
    $region18: #{tpu_custom_call.1} parent=1 // pred_check
      %p53 = pneg %p52
    $region19: #{tpu_custom_call.1} parent=1 // pred_check_branch
      %55 = sbr.rel (%p53) target = $region21
    $region20: #{tpu_custom_call.1} parent=1 // pred_region
      %56 = vst [vmem:[#allocation2] sm:$0x1] 0.0
    $region21: #{tpu_custom_call.1} parent=1 // pred_fallthru
      _
    %v57 = vld [vmem:[#allocation3] sm:$0xff]
    %v58 = vld [vmem:[#allocation3 + $0x8] sm:$0xff]
    %v59 = vld [vmem:[#allocation6] sm:$0xff]
    %v60 = vld [vmem:[#allocation6 + $0x8] sm:$0xff]
    %v61 = vsub.f32 1.0, %v57
    %v62 = vsub.f32 1.0, %v58
    %v63 = vlog2.pop %v57
    %v64 = vmul.f32 %v63, 0.6931472
    %v65 = vlog2.pop %v58
    %v66 = vmul.f32 %v65, 0.6931472
    %v67 = vmax.f32 %v64, -100.0
    %v68 = vmax.f32 %v66, -100.0
    %v69 = vlog2.pop %v61
    %v70 = vmul.f32 %v69, 0.6931472
    %v71 = vlog2.pop %v62
    %v72 = vmul.f32 %v71, 0.6931472
    %v73 = vmax.f32 %v70, -100.0
    %v74 = vmax.f32 %v72, -100.0
    %v75 = vmul.f32 %v59, %v67
    %v76 = vmul.f32 %v60, %v68
    %v77 = vsub.f32 1.0, %v59
    %v78 = vsub.f32 1.0, %v60
    %v79 = vmul.f32 %v77, %v73
    %v80 = vmul.f32 %v78, %v74
    %v81 = vadd.f32 %v75, %v79
    %v82 = vadd.f32 %v76, %v80
    %v83 = vsub.f32 0.0, %v81
    %v84 = vsub.f32 0.0, %v82
    %v85 = vld [vmem:[#allocation2] sm:$0x1]
    %v86 = vadd.f32 %v83, %v84
    %v87 = vrot.slane %v86, 4
    %v88 = vadd.f32 %v86, %v87
    %v89 = vrot.slane %v88, 2
    %v90 = vadd.f32 %v88, %v89
    %v91 = vrot.slane %v90, 1
    %v92 = vadd.f32 %v90, %v91
    %v93 = vadd.f32 %v85, %v92
    %94 = vst [vmem:[#allocation2] sm:$0x1] %v93
    // Predicated region
    $region22: #{tpu_custom_call.1} parent=1 // pred_check
      %p95 = pneg %p52
    $region23: #{tpu_custom_call.1} parent=1 // pred_check_branch
      %97 = sbr.rel (%p95) target = $region25
    $region24: #{tpu_custom_call.1} parent=1 // pred_region
      %v98 = vld [vmem:[#allocation2] sm:$0x1]
      %vm99 = vcmask 1040384
      %v100 = vsel %vm99, %v98, 0.0
      %101 = vadd.xlane.f32.xlu0 %v100
      %v102 = vpop.xlane.xlu0 %101
      %v103 = vrot.slane %v102, 4
      %v104 = vadd.f32 %v102, %v103
      %v105 = vrot.slane %v104, 2
      %v106 = vadd.f32 %v104, %v105
      %v107 = vrot.slane %v106, 1
      %v108 = vadd.f32 %v106, %v107
      %s109 = vtos %v108
      %s110 = scalar_lea.smem [#allocation8], 0
      %111 = sst [smem:[%s110]] %s109
    $region25: #{tpu_custom_call.1} parent=1 // pred_fallthru
      _
    // Predicated region
    $region26: #{tpu_custom_call.1} parent=1 // pred_check
      _
    $region27: #{tpu_custom_call.1} parent=1 // pred_check_branch
      %113 = sbr.rel (0) target = $region29
    $region28: #{tpu_custom_call.1} parent=1 // pred_region
      %s115 = ssub.s32 16, 16
      %116 = vsyncadd [#allocation5], %s115
      %119 = dma.smem_to_hbm [#allocation8], 16, %s2, [#allocation5]
    $region29: #{tpu_custom_call.1} parent=1 // pred_fallthru
      _
    // Predicated region
    $region30: #{tpu_custom_call.1} parent=1 // pred_check
      _
    $region31: #{tpu_custom_call.1} parent=1 // pred_check_branch
      %121 = sbr.rel (0) target = $region33
    $region32: #{tpu_custom_call.1} parent=1 // pred_region
      %122 = dma.done [#allocation5], 16
    $region33: #{tpu_custom_call.1} parent=1 // pred_fallthru
      _
    %123 = sfence
    %124 = vsyncpa [#allocation4], 1
    %125 = vsyncpa [#allocation7], 1
    %126 = vsyncpa [#allocation5], 1

</llo_original>
